<compile_context>
chip_gen: v5e
topology: v5e:2x2
jax: 0.10.0
libtpu: 0.0.40
codegen_flags: <defaults>
</compile_context>

<pallas_src>
import functools

import jax
import jax.numpy as jnp
import numpy as np
from jax.experimental import pallas as pl
from jax.experimental.pallas import tpu as pltpu


def _resblock_up_kernel(x_ref, shift_ref, gamma_ref, beta_ref, gmat_ref, gmat_t_ref,
                        masks_ref, wfused_ref, bias_ref, o_ref, *, spatial_w, eps):
    c = x_ref.shape[1]
    lanes = x_ref.shape[2]              # L = H*W (one sample per grid step), lane-dense
    g = gmat_ref.shape[1]
    W = spatial_w
    inv_cnt = 1.0 / float(lanes * (c // g))

    x = x_ref[0].astype(jnp.float32)    # (C, L): upcast at the register boundary only
    shift = shift_ref[0]                # (C, 1): Dense(embed) shift, f32
    gmat = gmat_ref[...]                # (C, G): channel->group one-hot
    gmat_t = gmat_t_ref[...]            # (G, C)

    # --- GroupNorm statistics of h = x + shift (two-pass / centered variance, f32).
    #     shift is constant over lanes, so its per-channel sum contribution is L*shift. ---
    ch_sum = jnp.sum(x, axis=-1, keepdims=True) + float(lanes) * shift       # (C, 1)
    g_mean = jnp.dot(gmat_t, ch_sum, preferred_element_type=jnp.float32) * inv_cnt
    mean_c = jnp.dot(gmat, g_mean, preferred_element_type=jnp.float32)       # (C, 1)

    hc = x + (shift - mean_c)                                                # (C, L)
    ch_sq = jnp.sum(hc * hc, axis=-1, keepdims=True)                         # (C, 1)
    g_var = jnp.dot(gmat_t, ch_sq, preferred_element_type=jnp.float32) * inv_cnt
    rstd_c = jnp.dot(gmat, jax.lax.rsqrt(g_var + eps),
                     preferred_element_type=jnp.float32)                     # (C, 1)

    hn = hc * (gamma_ref[...] * rstd_c) + beta_ref[...]
    hs = hn * jax.nn.sigmoid(hn)        # SiLU in f32 (VPU + EUP; no bf16 path on v5e)

    # --- ConvTranspose2d(k=3, s=2, p=1, op=1) via parity decomposition:
    # out[2i+r, 2j+s] depends only on h[i,j], h[i,j+1], h[i+1,j], h[i+1,j+1]. Shifts are
    # XLU lane rolls; wrap / boundary contamination is killed by precomputed masks. ---
    mdt = wfused_ref.dtype                                   # bf16 on the production path
    hs_m = hs.astype(mdt)
    masks = masks_ref[...]                                   # (3, L): mcol, mrow, mcol*mrow
    h_r = pltpu.roll(hs_m, lanes - 1, 1) * masks[0:1]        # h[i, j+1]
    h_d = pltpu.roll(hs_m, lanes - W, 1) * masks[1:2]        # h[i+1, j]
    h_dr = pltpu.roll(hs_m, lanes - W - 1, 1) * masks[2:3]   # h[i+1, j+1]

    # One fused MXU dot over all four taps (K = 4C), f32 accumulation.
    h_all = jnp.concatenate([hs_m, h_r, h_d, h_dr], axis=0)                  # (4C, L)
    y = (jnp.dot(wfused_ref[...], h_all, preferred_element_type=jnp.float32)
         + bias_ref[...])                                                    # (4Co, L)
    o_ref[0] = y.astype(o_ref.dtype)                         # lane-dense writeback


def resblock_up_one(x_nchw, embed, params, num_groups, *,
                    out_dtype=jnp.bfloat16, mxu_dtype=jnp.bfloat16, interleave=True):
    """ResblockUpOne forward. Returns (N, Co, 2H, 2W), or the parity-major
    (N, 2, 2, Co, H, W) layout if interleave=False (for fusion into a consumer)."""
    dense_w, dense_b = params["dense_w"], params["dense_b"]   # (C, E), (C,)
    gamma, beta = params["gn_gamma"], params["gn_beta"]       # (C,), (C,)
    wt, bt = params["ct_w"], params["ct_b"]                   # (C, Co, 3, 3), (Co,)

    n, c, hgt, wdt = x_nchw.shape
    co = wt.shape[1]
    hw = hgt * wdt
    g = num_groups

    # The parity/tap decomposition assumes kernel=3, stride=2, padding=1, output_padding=1.
    assert wt.shape == (c, co, 3, 3), wt.shape
    assert c % g == 0, (c, g)
    # TODO(synk): add HW tiling with a one-row halo when hw is not lane-aligned / too big.
    assert hw % 128 == 0, hw

    # x stays in its native dtype; (N,C,H,W) -> (N,C,HW) is a free contiguous reshape.
    x_flat = x_nchw.reshape(n, c, hw)

    # Dense(embed) hoisted out of the kernel (only N*C scalars), kept in f32.
    shift = (embed.astype(jnp.float32) @ dense_w.astype(jnp.float32).T
             + dense_b.astype(jnp.float32))
    shift_c = shift.reshape(n, c, 1)

    # Grid-invariant constants (single-buffered in VMEM).
    gmat = (jnp.arange(c)[:, None] // (c // g) == jnp.arange(g)[None, :]).astype(jnp.float32)
    gmat_t = gmat.T
    p = jnp.arange(hw)
    mcol = p % wdt != wdt - 1            # 0 where j == W-1
    mrow = p // wdt != hgt - 1           # 0 where i == H-1
    masks = jnp.stack([mcol, mrow, mcol & mrow]).astype(mxu_dtype)           # (3, HW)

    # Fused deconv weight: rows parity-major (r, s, Co); columns tap-major
    # [h(i,j) | h(i,j+1) | h(i+1,j) | h(i+1,j+1)], each block C wide.
    wT = jnp.transpose(wt.astype(jnp.float32), (1, 0, 2, 3))                 # (Co, C, 3, 3)
    z = jnp.zeros((co, c), jnp.float32)
    blk = lambda kh, kw: wT[:, :, kh, kw]
    tap0 = jnp.concatenate([blk(1, 1), blk(1, 2), blk(2, 1), blk(2, 2)], axis=0)  # h[i, j]
    tap1 = jnp.concatenate([z,         blk(1, 0), z,         blk(2, 0)], axis=0)  # h[i, j+1]
    tap2 = jnp.concatenate([z,         z,         blk(0, 1), blk(0, 2)], axis=0)  # h[i+1, j]
    tap3 = jnp.concatenate([z,         z,         z,         blk(0, 0)], axis=0)  # h[i+1, j+1]
    w_fused = jnp.concatenate([tap0, tap1, tap2, tap3], axis=1).astype(mxu_dtype)  # (4Co, 4C)
    bias_t = jnp.tile(bt.astype(jnp.float32), 4)[:, None]                    # (4Co, 1)

    def const_spec(*shape):
        zeros = (0,) * len(shape)
        return pl.BlockSpec(shape, lambda i, _z=zeros: _z, pipeline_mode=pl.Buffered(1))

    kernel = functools.partial(_resblock_up_kernel, spatial_w=wdt, eps=1e-5)
    out = pl.pallas_call(
        kernel,
        out_shape=jax.ShapeDtypeStruct((n, 4 * co, hw), out_dtype),
        grid=(n,),
        in_specs=[
            pl.BlockSpec((1, c, hw), lambda i: (i, 0, 0)),   # x (native dtype, lane-dense)
            pl.BlockSpec((1, c, 1), lambda i: (i, 0, 0)),    # Dense(embed) shift
            const_spec(c, 1),                                # gn gamma
            const_spec(c, 1),                                # gn beta
            const_spec(c, g),                                # channel->group one-hot
            const_spec(g, c),                                # its transpose
            const_spec(3, hw),                               # boundary masks (mxu dtype)
            const_spec(4 * co, 4 * c),                       # fused per-tap deconv weight
            const_spec(4 * co, 1),                           # deconv bias (x4 parities)
        ],
        out_specs=pl.BlockSpec((1, 4 * co, hw), lambda i: (i, 0, 0)),
        compiler_params=pltpu.CompilerParams(dimension_semantics=("parallel",)),
    )(x_flat, shift_c, gamma.astype(jnp.float32)[:, None], beta.astype(jnp.float32)[:, None],
      gmat, gmat_t, masks, w_fused, bias_t)

    y = out.reshape(n, 2, 2, co, hgt, wdt)           # parity-major (N, r, s, Co, H, W)
    if not interleave:
        return y
    # Pixel interleave to NCHW; runs in out_dtype (bf16 by default). Layout glue only.
    return jnp.transpose(y, (0, 3, 4, 1, 5, 2)).reshape(n, co, 2 * hgt, 2 * wdt)


def reference(x, embed, params, num_groups):
    """Pure-JAX reference matching the PyTorch ResblockUpOne forward exactly (NCHW)."""
    dense_w, dense_b = params["dense_w"], params["dense_b"]
    gamma, beta = params["gn_gamma"], params["gn_beta"]
    wt, bt = params["ct_w"], params["ct_b"]

    shift = embed @ dense_w.T + dense_b
    h = x + shift[:, :, None, None]

    n, c, hh, ww = h.shape
    g = num_groups
    hg = h.reshape(n, g, c // g, hh, ww)
    mean = hg.mean(axis=(2, 3, 4), keepdims=True)
    var = hg.var(axis=(2, 3, 4), keepdims=True)
    hn = (hg - mean) / jnp.sqrt(var + 1e-5)
    hn = hn.reshape(n, c, hh, ww) * gamma[None, :, None, None] + beta[None, :, None, None]
    hn = hn * jax.nn.sigmoid(hn)

    # ConvTranspose2d(s=2, p=1, op=1) as dilated conv with flipped / transposed kernel.
    w_conv = jnp.transpose(wt, (1, 0, 2, 3))[:, :, ::-1, ::-1]
    out = jax.lax.conv_general_dilated(
        hn, w_conv, window_strides=(1, 1), padding=((1, 2), (1, 2)),
        lhs_dilation=(2, 2), dimension_numbers=("NCHW", "OIHW", "NCHW"))
    return out + bt[None, :, None, None]


if __name__ == "__main__":
    n, c_in, c_out, embed_dim, num_groups = 2, 4, 8, 32, 2
    hgt = wdt = 16

    key = jax.random.PRNGKey(0)
    ks = jax.random.split(key, 8)
    x = jax.random.normal(ks[0], (n, c_in, hgt, wdt), jnp.float32)
    embed = jax.random.normal(ks[1], (n, embed_dim), jnp.float32)
    params = dict(
        dense_w=0.1 * jax.random.normal(ks[2], (c_in, embed_dim), jnp.float32),
        dense_b=0.1 * jax.random.normal(ks[3], (c_in,), jnp.float32),
        gn_gamma=1.0 + 0.1 * jax.random.normal(ks[4], (c_in,), jnp.float32),
        gn_beta=0.1 * jax.random.normal(ks[5], (c_in,), jnp.float32),
        ct_w=0.1 * jax.random.normal(ks[6], (c_in, c_out, 3, 3), jnp.float32),
        ct_b=0.1 * jax.random.normal(ks[7], (c_out,), jnp.float32),
    )

    ref = reference(x, embed, params, num_groups)

    # 1) Exactness check: f32 MXU operands + f32 writeback (algorithmic correctness).
    out_f32 = jax.block_until_ready(
        resblock_up_one(x, embed, params, num_groups,
                        out_dtype=jnp.float32, mxu_dtype=jnp.float32))
    assert out_f32.shape == (n, c_out, 2 * hgt, 2 * wdt), out_f32.shape
    np.testing.assert_allclose(np.asarray(out_f32), np.asarray(ref), rtol=1e-4, atol=1e-4)

    # 2) Production path (defaults): native bf16 input DMA, bf16 MXU/XLU operands,
    #    bf16 writeback + bf16 interleave; stats stay f32 in-kernel.
    out_bf16 = jax.block_until_ready(
        resblock_up_one(x.astype(jnp.bfloat16), embed, params, num_groups))
    np.testing.assert_allclose(np.asarray(out_bf16.astype(jnp.float32)), np.asarray(ref),
                               rtol=5e-2, atol=5e-2)

    print("KERNEL_OK")
</pallas_src>

<mosaic_0001>
module attributes {stable_mosaic.version = 11 : i64} {
  func.func @_resblock_up_kernel(%arg0: i32, %arg1: memref<1x4x256xf32, #tpu.memory_space<vmem>>, %arg2: memref<1x4x1xf32, #tpu.memory_space<vmem>>, %arg3: memref<4x1xf32, #tpu.memory_space<vmem>>, %arg4: memref<4x1xf32, #tpu.memory_space<vmem>>, %arg5: memref<4x2xf32, #tpu.memory_space<vmem>>, %arg6: memref<2x4xf32, #tpu.memory_space<vmem>>, %arg7: memref<3x256xf32, #tpu.memory_space<vmem>>, %arg8: memref<32x16xf32, #tpu.memory_space<vmem>>, %arg9: memref<32x1xf32, #tpu.memory_space<vmem>>, %arg10: memref<1x32x256xf32, #tpu.memory_space<vmem>>) attributes {dimension_semantics = [#tpu.dimension_semantics<parallel>], iteration_bounds = array<i64: 2>, scalar_prefetch = 0 : i64, scratch_operands = 0 : i64, tpu.core_type = #tpu.core_type<tc>, window_params = [{transform_indices = @transform_0, window_bounds = array<i64: 1, 4, 256>}, {transform_indices = @transform_1, window_bounds = array<i64: 1, 4, 1>}, {pipeline_mode = #tpu.pipeline_mode<synchronous>, transform_indices = @transform_2, window_bounds = array<i64: 4, 1>}, {pipeline_mode = #tpu.pipeline_mode<synchronous>, transform_indices = @transform_3, window_bounds = array<i64: 4, 1>}, {pipeline_mode = #tpu.pipeline_mode<synchronous>, transform_indices = @transform_4, window_bounds = array<i64: 4, 2>}, {pipeline_mode = #tpu.pipeline_mode<synchronous>, transform_indices = @transform_5, window_bounds = array<i64: 2, 4>}, {pipeline_mode = #tpu.pipeline_mode<synchronous>, transform_indices = @transform_6, window_bounds = array<i64: 3, 256>}, {pipeline_mode = #tpu.pipeline_mode<synchronous>, transform_indices = @transform_7, window_bounds = array<i64: 32, 16>}, {pipeline_mode = #tpu.pipeline_mode<synchronous>, transform_indices = @transform_8, window_bounds = array<i64: 32, 1>}, {transform_indices = @transform_9, window_bounds = array<i64: 1, 32, 256>}]} {
    %c0 = arith.constant 0 : index
    %c0_0 = arith.constant 0 : index
    %c0_1 = arith.constant 0 : index
    %0 = vector.load %arg1[%c0, %c0_0, %c0_1] : memref<1x4x256xf32, #tpu.memory_space<vmem>>, vector<1x4x256xf32>
    %1 = vector.shape_cast %0 : vector<1x4x256xf32> to vector<4x256xf32>
    %c0_2 = arith.constant 0 : index
    %c0_3 = arith.constant 0 : index
    %c0_4 = arith.constant 0 : index
    %2 = vector.load %arg2[%c0_2, %c0_3, %c0_4] : memref<1x4x1xf32, #tpu.memory_space<vmem>>, vector<1x4x1xf32>
    %3 = vector.shape_cast %2 : vector<1x4x1xf32> to vector<4x1xf32>
    %c0_5 = arith.constant 0 : index
    %c0_6 = arith.constant 0 : index
    %4 = vector.load %arg5[%c0_5, %c0_6] : memref<4x2xf32, #tpu.memory_space<vmem>>, vector<4x2xf32>
    %c0_7 = arith.constant 0 : index
    %c0_8 = arith.constant 0 : index
    %5 = vector.load %arg6[%c0_7, %c0_8] : memref<2x4xf32, #tpu.memory_space<vmem>>, vector<2x4xf32>
    %cst = arith.constant dense<0.000000e+00> : vector<4xf32>
    %6 = vector.multi_reduction <add>, %1, %cst [1] : vector<4x256xf32> to vector<4xf32>
    %7 = vector.shape_cast %6 : vector<4xf32> to vector<4x1xf32>
    %cst_9 = arith.constant 2.560000e+02 : f32
    %8 = vector.broadcast %cst_9 : f32 to vector<4x1xf32>
    %9 = arith.mulf %8, %3 : vector<4x1xf32>
    %10 = arith.addf %7, %9 : vector<4x1xf32>
    %cst_10 = arith.constant dense<0.000000e+00> : vector<2x1xf32>
    %11 = tpu.matmul %5, %10, %cst_10 {dimension_numbers = #tpu.dot_dimension_numbers<[1], [0], [0], [1], [0, 0, 1, 1], [], []>} : vector<2x4xf32>, vector<4x1xf32>, vector<2x1xf32> -> vector<2x1xf32>
    %cst_11 = arith.constant 0.001953125 : f32
    %12 = vector.broadcast %cst_11 : f32 to vector<2x1xf32>
    %13 = arith.mulf %11, %12 : vector<2x1xf32>
    %cst_12 = arith.constant dense<0.000000e+00> : vector<4x1xf32>
    %14 = tpu.matmul %4, %13, %cst_12 {dimension_numbers = #tpu.dot_dimension_numbers<[1], [0], [0], [1], [0, 0, 1, 1], [], []>} : vector<4x2xf32>, vector<2x1xf32>, vector<4x1xf32> -> vector<4x1xf32>
    %15 = arith.subf %3, %14 : vector<4x1xf32>
    %16 = vector.broadcast %15 : vector<4x1xf32> to vector<4x256xf32>
    %17 = arith.addf %1, %16 : vector<4x256xf32>
    %18 = arith.mulf %17, %17 : vector<4x256xf32>
    %cst_13 = arith.constant dense<0.000000e+00> : vector<4xf32>
    %19 = vector.multi_reduction <add>, %18, %cst_13 [1] : vector<4x256xf32> to vector<4xf32>
    %20 = vector.shape_cast %19 : vector<4xf32> to vector<4x1xf32>
    %cst_14 = arith.constant dense<0.000000e+00> : vector<2x1xf32>
    %21 = tpu.matmul %5, %20, %cst_14 {dimension_numbers = #tpu.dot_dimension_numbers<[1], [0], [0], [1], [0, 0, 1, 1], [], []>} : vector<2x4xf32>, vector<4x1xf32>, vector<2x1xf32> -> vector<2x1xf32>
    %cst_15 = arith.constant 0.001953125 : f32
    %22 = vector.broadcast %cst_15 : f32 to vector<2x1xf32>
    %23 = arith.mulf %21, %22 : vector<2x1xf32>
    %cst_16 = arith.constant 9.99999974E-6 : f32
    %24 = vector.broadcast %cst_16 : f32 to vector<2x1xf32>
    %25 = arith.addf %23, %24 : vector<2x1xf32>
    %26 = math.rsqrt %25 : vector<2x1xf32>
    %cst_17 = arith.constant dense<0.000000e+00> : vector<4x1xf32>
    %27 = tpu.matmul %4, %26, %cst_17 {dimension_numbers = #tpu.dot_dimension_numbers<[1], [0], [0], [1], [0, 0, 1, 1], [], []>} : vector<4x2xf32>, vector<2x1xf32>, vector<4x1xf32> -> vector<4x1xf32>
    %c0_18 = arith.constant 0 : index
    %c0_19 = arith.constant 0 : index
    %28 = vector.load %arg3[%c0_18, %c0_19] : memref<4x1xf32, #tpu.memory_space<vmem>>, vector<4x1xf32>
    %29 = arith.mulf %28, %27 : vector<4x1xf32>
    %30 = vector.broadcast %29 : vector<4x1xf32> to vector<4x256xf32>
    %31 = arith.mulf %17, %30 : vector<4x256xf32>
    %c0_20 = arith.constant 0 : index
    %c0_21 = arith.constant 0 : index
    %32 = vector.load %arg4[%c0_20, %c0_21] : memref<4x1xf32, #tpu.memory_space<vmem>>, vector<4x1xf32>
    %33 = vector.broadcast %32 : vector<4x1xf32> to vector<4x256xf32>
    %34 = arith.addf %31, %33 : vector<4x256xf32>
    %35 = arith.negf %34 : vector<4x256xf32>
    %36 = math.exp %35 : vector<4x256xf32>
    %cst_22 = arith.constant 1.000000e+00 : f32
    %37 = vector.broadcast %cst_22 : f32 to vector<4x256xf32>
    %38 = arith.addf %37, %36 : vector<4x256xf32>
    %39 = arith.divf %37, %38 : vector<4x256xf32>
    %40 = arith.mulf %34, %39 : vector<4x256xf32>
    %c0_23 = arith.constant 0 : index
    %c0_24 = arith.constant 0 : index
    %41 = vector.load %arg7[%c0_23, %c0_24] : memref<3x256xf32, #tpu.memory_space<vmem>>, vector<3x256xf32>
    %c255_i32 = arith.constant 255 : i32
    %42 = tpu.dynamic_rotate %40 by %c255_i32 dim 1 : vector<4x256xf32>, i32 -> vector<4x256xf32>
    %43 = vector.extract_strided_slice %41 {offsets = [0, 0], sizes = [1, 256], strides = [1, 1]} : vector<3x256xf32> to vector<1x256xf32>
    %44 = vector.broadcast %43 : vector<1x256xf32> to vector<4x256xf32>
    %45 = arith.mulf %42, %44 : vector<4x256xf32>
    %c240_i32 = arith.constant 240 : i32
    %46 = tpu.dynamic_rotate %40 by %c240_i32 dim 1 : vector<4x256xf32>, i32 -> vector<4x256xf32>
    %47 = vector.extract_strided_slice %41 {offsets = [1, 0], sizes = [1, 256], strides = [1, 1]} : vector<3x256xf32> to vector<1x256xf32>
    %48 = vector.broadcast %47 : vector<1x256xf32> to vector<4x256xf32>
    %49 = arith.mulf %46, %48 : vector<4x256xf32>
    %c239_i32 = arith.constant 239 : i32
    %50 = tpu.dynamic_rotate %40 by %c239_i32 dim 1 : vector<4x256xf32>, i32 -> vector<4x256xf32>
    %51 = vector.extract_strided_slice %41 {offsets = [2, 0], sizes = [1, 256], strides = [1, 1]} : vector<3x256xf32> to vector<1x256xf32>
    %52 = vector.broadcast %51 : vector<1x256xf32> to vector<4x256xf32>
    %53 = arith.mulf %50, %52 : vector<4x256xf32>
    %54 = tpu.concatenate %40, %45, %49, %53 in 0 : vector<4x256xf32>, vector<4x256xf32>, vector<4x256xf32>, vector<4x256xf32> -> vector<16x256xf32>
    %c0_25 = arith.constant 0 : index
    %c0_26 = arith.constant 0 : index
    %55 = vector.load %arg8[%c0_25, %c0_26] : memref<32x16xf32, #tpu.memory_space<vmem>>, vector<32x16xf32>
    %cst_27 = arith.constant dense<0.000000e+00> : vector<32x256xf32>
    %56 = tpu.matmul %55, %54, %cst_27 {dimension_numbers = #tpu.dot_dimension_numbers<[1], [0], [0], [1], [0, 0, 1, 1], [], []>} : vector<32x16xf32>, vector<16x256xf32>, vector<32x256xf32> -> vector<32x256xf32>
    %c0_28 = arith.constant 0 : index
    %c0_29 = arith.constant 0 : index
    %57 = vector.load %arg9[%c0_28, %c0_29] : memref<32x1xf32, #tpu.memory_space<vmem>>, vector<32x1xf32>
    %58 = vector.broadcast %57 : vector<32x1xf32> to vector<32x256xf32>
    %59 = arith.addf %56, %58 : vector<32x256xf32>
    %c0_30 = arith.constant 0 : index
    %c0_31 = arith.constant 0 : index
    %c0_32 = arith.constant 0 : index
    %60 = vector.load %arg10[%c0_30, %c0_31, %c0_32] : memref<1x32x256xf32, #tpu.memory_space<vmem>>, vector<1x32x256xf32>
    %61 = vector.shape_cast %60 : vector<1x32x256xf32> to vector<32x256xf32>
    %62 = vector.shape_cast %59 : vector<32x256xf32> to vector<1x32x256xf32>
    tpu.vector_store %arg10[%c0_30, %c0_31, %c0_32], %62 {strides = array<i32>} : memref<1x32x256xf32, #tpu.memory_space<vmem>>, vector<1x32x256xf32>,
    return
  }
  func.func @transform_0(%arg0: i32) -> (i32, i32, i32) {
    %c0_i32 = arith.constant 0 : i32
    %c0_i32_0 = arith.constant 0 : i32
    %c0_i32_1 = arith.constant 0 : i32
    return %arg0, %c0_i32, %c0_i32_0 : i32, i32, i32
  }
  func.func @transform_1(%arg0: i32) -> (i32, i32, i32) {
    %c0_i32 = arith.constant 0 : i32
    %c0_i32_0 = arith.constant 0 : i32
    %c0_i32_1 = arith.constant 0 : i32
    return %arg0, %c0_i32, %c0_i32_0 : i32, i32, i32
  }
  func.func @transform_2(%arg0: i32) -> (i32, i32) {
    %c0_i32 = arith.constant 0 : i32
    %c0_i32_0 = arith.constant 0 : i32
    %c0_i32_1 = arith.constant 0 : i32
    return %c0_i32, %c0_i32_0 : i32, i32
  }
  func.func @transform_3(%arg0: i32) -> (i32, i32) {
    %c0_i32 = arith.constant 0 : i32
    %c0_i32_0 = arith.constant 0 : i32
    %c0_i32_1 = arith.constant 0 : i32
    return %c0_i32, %c0_i32_0 : i32, i32
  }
  func.func @transform_4(%arg0: i32) -> (i32, i32) {
    %c0_i32 = arith.constant 0 : i32
    %c0_i32_0 = arith.constant 0 : i32
    %c0_i32_1 = arith.constant 0 : i32
    return %c0_i32, %c0_i32_0 : i32, i32
  }
  func.func @transform_5(%arg0: i32) -> (i32, i32) {
    %c0_i32 = arith.constant 0 : i32
    %c0_i32_0 = arith.constant 0 : i32
    %c0_i32_1 = arith.constant 0 : i32
    return %c0_i32, %c0_i32_0 : i32, i32
  }
  func.func @transform_6(%arg0: i32) -> (i32, i32) {
    %c0_i32 = arith.constant 0 : i32
    %c0_i32_0 = arith.constant 0 : i32
    %c0_i32_1 = arith.constant 0 : i32
    return %c0_i32, %c0_i32_0 : i32, i32
  }
  func.func @transform_7(%arg0: i32) -> (i32, i32) {
    %c0_i32 = arith.constant 0 : i32
    %c0_i32_0 = arith.constant 0 : i32
    %c0_i32_1 = arith.constant 0 : i32
    return %c0_i32, %c0_i32_0 : i32, i32
  }
  func.func @transform_8(%arg0: i32) -> (i32, i32) {
    %c0_i32 = arith.constant 0 : i32
    %c0_i32_0 = arith.constant 0 : i32
    %c0_i32_1 = arith.constant 0 : i32
    return %c0_i32, %c0_i32_0 : i32, i32
  }
  func.func @transform_9(%arg0: i32) -> (i32, i32, i32) {
    %c0_i32 = arith.constant 0 : i32
    %c0_i32_0 = arith.constant 0 : i32
    %c0_i32_1 = arith.constant 0 : i32
    return %arg0, %c0_i32, %c0_i32_0 : i32, i32, i32
  }
}

</mosaic_0001>

<llo_original>
// kernel: tpu_custom_call.1
$region0: #{tpu_custom_call.1}
  #allocation0 [shape = 'u32[]', space=smem, size = 0x4, offset = 0x4, fixed_abs, tag = 'smem constant byte address 0x4 - core index']
  #allocation1 [shape = 'u32[72,128]{1,0:T(1,128)}', space=vmem, size = 0x9000, scoped, tag = 'internal scratch']
  %s0 = inlined_call_operand.vmem [shape: f32[2,4,256], index: 0, kind: input, shape index: {}]
  %s1 = inlined_call_operand.vmem [shape: f32[2,4,1], index: 1, kind: input, shape index: {}]
  %s2 = inlined_call_operand.vmem [shape: f32[4,1], index: 2, kind: input, shape index: {}]
  %s3 = inlined_call_operand.vmem [shape: f32[4,1], index: 3, kind: input, shape index: {}]
  %s4 = inlined_call_operand.vmem [shape: f32[4,2], index: 4, kind: input, shape index: {}]
  %s5 = inlined_call_operand.vmem [shape: f32[2,4], index: 5, kind: input, shape index: {}]
  %s6 = inlined_call_operand.vmem [shape: f32[3,256], index: 6, kind: input, shape index: {}]
  %s7 = inlined_call_operand.vmem [shape: f32[32,16], index: 7, kind: input, shape index: {}]
  %s8 = inlined_call_operand.vmem [shape: f32[32,1], index: 8, kind: input, shape index: {}]
  %s9 = inlined_call_operand.hbm [shape: f32[2,32,256], index: 9, kind: output, shape index: {}]
  %s10 = sld [smem:[#allocation0]]
  $region69: #{tpu_custom_call.1} parent=0
    _
  %s12 = ssub.s32 1, %s10
  %s13 = scalar_select 0, %s12, %s10
  $region1: #{tpu_custom_call.1} parent=0
    #allocation2 [shape = 'u8[65536]{0}', space=vmem, size = 0x10000, scoped, tag = 'output window, operand 0']
    #allocation3 [shape = 's32[2]{0}', space=sflag, size = 0x8, scoped, tag = 'scoped memory for tpu_custom_call.1']
    %14 = vsyncpa [#allocation3], 0
    %s15 = scalar_lea.sflag [#allocation3], 1
    %16 = vsyncpa %s15, 0
    loop: start=0, step=1, limit=4
    $region2: #{tpu_custom_call.1} parent=1 // loop_pre_header
      _
    $region3: #{tpu_custom_call.1} parent=1 // loop_header
      %s18 = sphi 0, %s22
      %p19 = scmp.ge.s32.totalorder %s18, 4
      %s28 = sphi 0, %s30
      %s31 = sphi 0, %s28
      %s32 = sphi 0, %s31
      %s48 = sphi 0, %s32
      %s54 = sphi 0, %s56
      %s57 = sphi 0, %s54
      %s58 = sphi 0, %s57
      %s74 = sphi 0, %s58
      %s78 = sphi 0, %s78
      %s80 = sphi 0, %s78
      %s81 = sphi 0, %s80
      %s95 = sphi 0, %s81
      %s99 = sphi 0, %s99
      %s101 = sphi 0, %s99
      %s102 = sphi 0, %s101
      %s116 = sphi 0, %s102
      %s120 = sphi 0, %s120
      %s122 = sphi 0, %s120
      %s123 = sphi 0, %s122
      %s137 = sphi 0, %s123
      %s141 = sphi 0, %s141
      %s143 = sphi 0, %s141
      %s144 = sphi 0, %s143
      %s158 = sphi 0, %s144
      %s162 = sphi 0, %s162
      %s164 = sphi 0, %s162
      %s165 = sphi 0, %s164
      %s179 = sphi 0, %s165
      %s183 = sphi 0, %s183
      %s185 = sphi 0, %s183
      %s186 = sphi 0, %s185
      %s200 = sphi 0, %s186
      %s204 = sphi 0, %s204
      %s206 = sphi 0, %s204
      %s207 = sphi 0, %s206
      %s221 = sphi 0, %s207
      %s227 = sphi 0, %s229
      %s230 = sphi 0, %s227
      %s231 = sphi 0, %s230
      %s247 = sphi 0, %s231
    $region4: #{tpu_custom_call.1} parent=1 // loop_header_branch
      %21 = sbr.rel (%p19) target = $region8
    $region5: #{tpu_custom_call.1} parent=1 // loop_body
      %s23 = ssub.s32 %s18, 1
      %s24 = ssub.s32 %s18, 2
      %s25 = sadd.s32 %s18, 1
      %s26 = ssub.s32 %s18, %s25
      %p27 = scmp.eq.s32.totalorder %s26, 0
      %s29 = sadd.s32 %s28, 1
      %s30 = scalar_select %p27, %s28, %s29
      %p33 = pneg %p27
      %p34 = scmp.eq.s32.totalorder %s18, 1
      %p35 = por %p33, %p34
      %p36 = scmp.ne.s32.totalorder %s28, %s31
      %p37 = scmp.eq.s32.totalorder %s18, 0
      %p38 = por %p36, %p37
      %p39 = scmp.ne.s32.totalorder %s28, %s31
      %p40 = scmp.eq.s32.totalorder %s23, 1
      %p41 = por %p39, %p40
      %p42 = scmp.ne.s32.totalorder %s31, %s32
      %p43 = scmp.eq.s32.totalorder %s23, 0
      %p44 = por %p42, %p43
      %p45 = scmp.ne.s32.totalorder %s31, %s32
      %p46 = scmp.eq.s32.totalorder %s24, 1
      %p47 = por %p45, %p46
      %p49 = scmp.ne.s32.totalorder %s32, %s48
      %p50 = scmp.eq.s32.totalorder %s24, 0
      %p51 = por %p49, %p50
      %s52 = ssub.s32 %s18, %s25
      %p53 = scmp.eq.s32.totalorder %s52, 0
      %s55 = sadd.s32 %s54, 1
      %s56 = scalar_select %p53, %s54, %s55
      %p59 = pneg %p53
      %p60 = scmp.eq.s32.totalorder %s18, 1
      %p61 = por %p59, %p60
      %p62 = scmp.ne.s32.totalorder %s54, %s57
      %p63 = scmp.eq.s32.totalorder %s18, 0
      %p64 = por %p62, %p63
      %p65 = scmp.ne.s32.totalorder %s54, %s57
      %p66 = scmp.eq.s32.totalorder %s23, 1
      %p67 = por %p65, %p66
      %p68 = scmp.ne.s32.totalorder %s57, %s58
      %p69 = scmp.eq.s32.totalorder %s23, 0
      %p70 = por %p68, %p69
      %p71 = scmp.ne.s32.totalorder %s57, %s58
      %p72 = scmp.eq.s32.totalorder %s24, 1
      %p73 = por %p71, %p72
      %p75 = scmp.ne.s32.totalorder %s58, %s74
      %p76 = scmp.eq.s32.totalorder %s24, 0
      %p77 = por %p75, %p76
      %s79 = sadd.s32 %s78, 1
      %p82 = scmp.eq.s32.totalorder %s18, 1
      %p83 = scmp.ne.s32.totalorder %s78, %s80
      %p84 = scmp.eq.s32.totalorder %s18, 0
      %p85 = por %p83, %p84
      %p86 = scmp.ne.s32.totalorder %s78, %s80
      %p87 = scmp.eq.s32.totalorder %s23, 1
      %p88 = por %p86, %p87
      %p89 = scmp.ne.s32.totalorder %s80, %s81
      %p90 = scmp.eq.s32.totalorder %s23, 0
      %p91 = por %p89, %p90
      %p92 = scmp.ne.s32.totalorder %s80, %s81
      %p93 = scmp.eq.s32.totalorder %s24, 1
      %p94 = por %p92, %p93
      %p96 = scmp.ne.s32.totalorder %s81, %s95
      %p97 = scmp.eq.s32.totalorder %s24, 0
      %p98 = por %p96, %p97
      %s100 = sadd.s32 %s99, 1
      %p103 = scmp.eq.s32.totalorder %s18, 1
      %p104 = scmp.ne.s32.totalorder %s99, %s101
      %p105 = scmp.eq.s32.totalorder %s18, 0
      %p106 = por %p104, %p105
      %p107 = scmp.ne.s32.totalorder %s99, %s101
      %p108 = scmp.eq.s32.totalorder %s23, 1
      %p109 = por %p107, %p108
      %p110 = scmp.ne.s32.totalorder %s101, %s102
      %p111 = scmp.eq.s32.totalorder %s23, 0
      %p112 = por %p110, %p111
      %p113 = scmp.ne.s32.totalorder %s101, %s102
      %p114 = scmp.eq.s32.totalorder %s24, 1
      %p115 = por %p113, %p114
      %p117 = scmp.ne.s32.totalorder %s102, %s116
      %p118 = scmp.eq.s32.totalorder %s24, 0
      %p119 = por %p117, %p118
      %s121 = sadd.s32 %s120, 1
      %p124 = scmp.eq.s32.totalorder %s18, 1
      %p125 = scmp.ne.s32.totalorder %s120, %s122
      %p126 = scmp.eq.s32.totalorder %s18, 0
      %p127 = por %p125, %p126
      %p128 = scmp.ne.s32.totalorder %s120, %s122
      %p129 = scmp.eq.s32.totalorder %s23, 1
      %p130 = por %p128, %p129
      %p131 = scmp.ne.s32.totalorder %s122, %s123
      %p132 = scmp.eq.s32.totalorder %s23, 0
      %p133 = por %p131, %p132
      %p134 = scmp.ne.s32.totalorder %s122, %s123
      %p135 = scmp.eq.s32.totalorder %s24, 1
      %p136 = por %p134, %p135
      %p138 = scmp.ne.s32.totalorder %s123, %s137
      %p139 = scmp.eq.s32.totalorder %s24, 0
      %p140 = por %p138, %p139
      %s142 = sadd.s32 %s141, 1
      %p145 = scmp.eq.s32.totalorder %s18, 1
      %p146 = scmp.ne.s32.totalorder %s141, %s143
      %p147 = scmp.eq.s32.totalorder %s18, 0
      %p148 = por %p146, %p147
      %p149 = scmp.ne.s32.totalorder %s141, %s143
      %p150 = scmp.eq.s32.totalorder %s23, 1
      %p151 = por %p149, %p150
      %p152 = scmp.ne.s32.totalorder %s143, %s144
      %p153 = scmp.eq.s32.totalorder %s23, 0
      %p154 = por %p152, %p153
      %p155 = scmp.ne.s32.totalorder %s143, %s144
      %p156 = scmp.eq.s32.totalorder %s24, 1
      %p157 = por %p155, %p156
      %p159 = scmp.ne.s32.totalorder %s144, %s158
      %p160 = scmp.eq.s32.totalorder %s24, 0
      %p161 = por %p159, %p160
      %s163 = sadd.s32 %s162, 1
      %p166 = scmp.eq.s32.totalorder %s18, 1
      %p167 = scmp.ne.s32.totalorder %s162, %s164
      %p168 = scmp.eq.s32.totalorder %s18, 0
      %p169 = por %p167, %p168
      %p170 = scmp.ne.s32.totalorder %s162, %s164
      %p171 = scmp.eq.s32.totalorder %s23, 1
      %p172 = por %p170, %p171
      %p173 = scmp.ne.s32.totalorder %s164, %s165
      %p174 = scmp.eq.s32.totalorder %s23, 0
      %p175 = por %p173, %p174
      %p176 = scmp.ne.s32.totalorder %s164, %s165
      %p177 = scmp.eq.s32.totalorder %s24, 1
      %p178 = por %p176, %p177
      %p180 = scmp.ne.s32.totalorder %s165, %s179
      %p181 = scmp.eq.s32.totalorder %s24, 0
      %p182 = por %p180, %p181
      %s184 = sadd.s32 %s183, 1
      %p187 = scmp.eq.s32.totalorder %s18, 1
      %p188 = scmp.ne.s32.totalorder %s183, %s185
      %p189 = scmp.eq.s32.totalorder %s18, 0
      %p190 = por %p188, %p189
      %p191 = scmp.ne.s32.totalorder %s183, %s185
      %p192 = scmp.eq.s32.totalorder %s23, 1
      %p193 = por %p191, %p192
      %p194 = scmp.ne.s32.totalorder %s185, %s186
      %p195 = scmp.eq.s32.totalorder %s23, 0
      %p196 = por %p194, %p195
      %p197 = scmp.ne.s32.totalorder %s185, %s186
      %p198 = scmp.eq.s32.totalorder %s24, 1
      %p199 = por %p197, %p198
      %p201 = scmp.ne.s32.totalorder %s186, %s200
      %p202 = scmp.eq.s32.totalorder %s24, 0
      %p203 = por %p201, %p202
      %s205 = sadd.s32 %s204, 1
      %p208 = scmp.eq.s32.totalorder %s18, 1
      %p209 = scmp.ne.s32.totalorder %s204, %s206
      %p210 = scmp.eq.s32.totalorder %s18, 0
      %p211 = por %p209, %p210
      %p212 = scmp.ne.s32.totalorder %s204, %s206
      %p213 = scmp.eq.s32.totalorder %s23, 1
      %p214 = por %p212, %p213
      %p215 = scmp.ne.s32.totalorder %s206, %s207
      %p216 = scmp.eq.s32.totalorder %s23, 0
      %p217 = por %p215, %p216
      %p218 = scmp.ne.s32.totalorder %s206, %s207
      %p219 = scmp.eq.s32.totalorder %s24, 1
      %p220 = por %p218, %p219
      %p222 = scmp.ne.s32.totalorder %s207, %s221
      %p223 = scmp.eq.s32.totalorder %s24, 0
      %p224 = por %p222, %p223
      %s225 = ssub.s32 %s18, %s25
      %p226 = scmp.eq.s32.totalorder %s225, 0
      %s228 = sadd.s32 %s227, 1
      %s229 = scalar_select %p226, %s227, %s228
      %p232 = pneg %p226
      %p233 = scmp.eq.s32.totalorder %s18, 1
      %p234 = por %p232, %p233
      %p235 = scmp.ne.s32.totalorder %s227, %s230
      %p236 = scmp.eq.s32.totalorder %s18, 0
      %p237 = por %p235, %p236
      %p238 = scmp.ne.s32.totalorder %s227, %s230
      %p239 = scmp.eq.s32.totalorder %s23, 1
      %p240 = por %p238, %p239
      %p241 = scmp.ne.s32.totalorder %s230, %s231
      %p242 = scmp.eq.s32.totalorder %s23, 0
      %p243 = por %p241, %p242
      %p244 = scmp.ne.s32.totalorder %s230, %s231
      %p245 = scmp.eq.s32.totalorder %s24, 1
      %p246 = por %p244, %p245
      %p248 = scmp.ne.s32.totalorder %s231, %s247
      %p249 = scmp.eq.s32.totalorder %s24, 0
      %p250 = por %p248, %p249
      %p251 = scmp.le.s32.totalorder 1, %s18
      %p252 = scmp.lt.s32.totalorder %s18, 3
      %p253 = pnand %p251, %p252
      %p254 = pneg %p253
      // Predicated region
      $region9: #{tpu_custom_call.1} parent=5 // pred_check
        _
      $region10: #{tpu_custom_call.1} parent=5 // pred_check_branch
        %256 = sbr.rel (%p253) target = $region12
      $region11: #{tpu_custom_call.1} parent=5 // pred_region
        %s257 = ssub.s32 %s18, 1
        // Predicated region
        $region13: #{tpu_custom_call.1} parent=11 // pred_check
          %p258 = pneg %p91
        $region14: #{tpu_custom_call.1} parent=11 // pred_check_branch
          %260 = sbr.rel (%p258) target = $region16
        $region15: #{tpu_custom_call.1} parent=11 // pred_region
          _
        $region16: #{tpu_custom_call.1} parent=11 // pred_fallthru
          _
        // Predicated region
        $region17: #{tpu_custom_call.1} parent=11 // pred_check
          %p261 = pneg %p112
        $region18: #{tpu_custom_call.1} parent=11 // pred_check_branch
          %263 = sbr.rel (%p261) target = $region20
        $region19: #{tpu_custom_call.1} parent=11 // pred_region
          _
        $region20: #{tpu_custom_call.1} parent=11 // pred_fallthru
          _
        // Predicated region
        $region21: #{tpu_custom_call.1} parent=11 // pred_check
          %p264 = pneg %p133
        $region22: #{tpu_custom_call.1} parent=11 // pred_check_branch
          %266 = sbr.rel (%p264) target = $region24
        $region23: #{tpu_custom_call.1} parent=11 // pred_region
          _
        $region24: #{tpu_custom_call.1} parent=11 // pred_fallthru
          _
        // Predicated region
        $region25: #{tpu_custom_call.1} parent=11 // pred_check
          %p267 = pneg %p154
        $region26: #{tpu_custom_call.1} parent=11 // pred_check_branch
          %269 = sbr.rel (%p267) target = $region28
        $region27: #{tpu_custom_call.1} parent=11 // pred_region
          _
        $region28: #{tpu_custom_call.1} parent=11 // pred_fallthru
          _
        // Predicated region
        $region29: #{tpu_custom_call.1} parent=11 // pred_check
          %p270 = pneg %p175
        $region30: #{tpu_custom_call.1} parent=11 // pred_check_branch
          %272 = sbr.rel (%p270) target = $region32
        $region31: #{tpu_custom_call.1} parent=11 // pred_region
          _
        $region32: #{tpu_custom_call.1} parent=11 // pred_fallthru
          _
        // Predicated region
        $region33: #{tpu_custom_call.1} parent=11 // pred_check
          %p273 = pneg %p196
        $region34: #{tpu_custom_call.1} parent=11 // pred_check_branch
          %275 = sbr.rel (%p273) target = $region36
        $region35: #{tpu_custom_call.1} parent=11 // pred_region
          _
        $region36: #{tpu_custom_call.1} parent=11 // pred_fallthru
          _
        // Predicated region
        $region37: #{tpu_custom_call.1} parent=11 // pred_check
          %p276 = pneg %p217
        $region38: #{tpu_custom_call.1} parent=11 // pred_check_branch
          %278 = sbr.rel (%p276) target = $region40
        $region39: #{tpu_custom_call.1} parent=11 // pred_region
          _
        $region40: #{tpu_custom_call.1} parent=11 // pred_fallthru
          _
      $region12: #{tpu_custom_call.1} parent=5 // pred_fallthru
        _
      %p279 = scmp.lt.s32.totalorder %s18, 2
      // Predicated region
      $region41: #{tpu_custom_call.1} parent=5 // pred_check
        %p280 = pneg %p279
      $region42: #{tpu_custom_call.1} parent=5 // pred_check_branch
        %282 = sbr.rel (%p280) target = $region44
      $region43: #{tpu_custom_call.1} parent=5 // pred_region
        // Predicated region
        $region45: #{tpu_custom_call.1} parent=43 // pred_check
          %p283 = pneg %p38
        $region46: #{tpu_custom_call.1} parent=43 // pred_check_branch
          %285 = sbr.rel (%p283) target = $region48
        $region47: #{tpu_custom_call.1} parent=43 // pred_region
          %p286 = scmp.lt.s32.totalorder %s18, 1
          %s287 = scalar_select %p286, %s18, 1
          %s288 = smul.addr %s287, 2
          %s289 = smul.addr %s288, 4
          %s290 = scalar_lea.vmem %s0, %s289
        $region48: #{tpu_custom_call.1} parent=43 // pred_fallthru
          _
        // Predicated region
        $region49: #{tpu_custom_call.1} parent=43 // pred_check
          %p291 = pneg %p64
        $region50: #{tpu_custom_call.1} parent=43 // pred_check_branch
          %293 = sbr.rel (%p291) target = $region52
        $region51: #{tpu_custom_call.1} parent=43 // pred_region
          %p294 = scmp.lt.s32.totalorder %s18, 1
          %s295 = scalar_select %p294, %s18, 1
          %s296 = smul.addr %s295, 4
          %s297 = scalar_lea.vmem %s1, %s296
        $region52: #{tpu_custom_call.1} parent=43 // pred_fallthru
          _
      $region44: #{tpu_custom_call.1} parent=5 // pred_fallthru
        _
      %p298 = scmp.le.s32.totalorder 1, %s18
      %p299 = scmp.lt.s32.totalorder %s18, 3
      %p300 = pnand %p298, %p299
      %p301 = pneg %p300
      // Predicated region
      $region53: #{tpu_custom_call.1} parent=5 // pred_check
        _
      $region54: #{tpu_custom_call.1} parent=5 // pred_check_branch
        %303 = sbr.rel (%p300) target = $region56
      $region55: #{tpu_custom_call.1} parent=5 // pred_region
        %s304 = ssub.s32 %s18, 1
        %p305 = scmp.lt.s32.totalorder %s23, 1
        %s306 = scalar_select %p305, %s23, 1
        %s307 = smul.addr %s306, 2
        %s308 = smul.addr %s307, 4
        %s309 = scalar_lea.vmem %s0, %s308
        %p310 = pneg %p44
        %p311 = pneg %p41
        %p312 = scmp.lt.s32.totalorder %s23, 1
        %s313 = scalar_select %p312, %s23, 1
        %s314 = smul.addr %s313, 4
        %s315 = scalar_lea.vmem %s1, %s314
        %p316 = pneg %p70
        %p317 = pneg %p67
        %p318 = pneg %p91
        %p319 = pneg %p88
        %p320 = pneg %p112
        %p321 = pneg %p109
        %p322 = pneg %p133
        %p323 = pneg %p130
        %p324 = pneg %p154
        %p325 = pneg %p151
        %p326 = pneg %p175
        %p327 = pneg %p172
        %p328 = pneg %p196
        %p329 = pneg %p193
        %p330 = pneg %p217
        %p331 = pneg %p214
        %p332 = pneg %p243
        %p333 = pneg %p240
        %s334 = sand.u32 %s230, 1
        %s335 = scalar_lea.sflag [#allocation3], %s334
        %s336 = sand.u32 %s230, 1
        %s337 = smul.addr %s336, 64
        %s338 = scalar_lea.vmem [#allocation2], %s337
        %p339 = scmp.lt.s32.totalorder %s23, 1
        %s340 = scalar_select %p339, %s23, 1
        %s341 = smul.addr %s340, 2
        %s342 = smul.addr %s341, 4
        %s343 = scalar_lea.vmem %s0, %s342
        %p344 = scmp.lt.s32.totalorder %s23, 1
        %s345 = scalar_select %p344, %s23, 1
        %s346 = smul.addr %s345, 4
        %s347 = scalar_lea.vmem %s1, %s346
        %v348 = vld [vmem:[%s343] sm:$0xff]
        %v349 = vld [vmem:[%s347] sm:$0xf]
        %v350 = vld [vmem:[%s4] sm:$0xf]
        %v351 = vld [vmem:[%s5] sm:$0x3]
        %353 = vst [vmem:[#allocation1] ss:$2 sm:$0xff] %v348
        %v354 = vld.sshfl [vmem:[#allocation1] sm:$0xff pattern:$0x75316420]
        %v355 = vld.sshfl [vmem:[#allocation1 + $0x8] sm:$0xff pattern:$0x75316420]
        %vm358 = vcmask 1043456
        %v359 = vsel %vm358, %v354, 0.0
        %v360 = vsel %vm358, %v355, 0.0
        %v361 = vadd.f32 %v359, %v360
        %362 = vadd.xlane.f32.xlu0 %v361
        %v363 = vpop.xlane.xlu0 %362
        %v364 = vmul.f32 %v349, 256.0
        %v365 = vadd.f32 %v363, %v364
        %vm366 = vcmask 31744
        %v368 = vsel %vm366, %v351, 0
        %v371 = vsel %vm358, %v365, 0
        %373 = vmatpush.msra.mxu0 0.0
        %374 = vmatpush.msra.mxu0 0.0
        %375 = vmatpush.msra.mxu0 0.0
        %376 = vmatpush.msra.mxu0 0.0
        %377 = vmatpush.msra.mxu0 0.0
        %378 = vmatpush.msra.mxu0 0.0
        %379 = vmatpush.msra.mxu0 0.0
        %380 = vmatpush.msra.mxu0 0.0
        %381 = vmatpush.msra.mxu0 0.0
        %382 = vmatpush.msra.mxu0 0.0
        %383 = vmatpush.msra.mxu0 0.0
        %384 = vmatpush.msra.mxu0 0.0
        %385 = vmatpush.msra.mxu0 0.0
        %386 = vmatpush.msra.mxu0 0.0
        %387 = vmatpush.msra.mxu0 0.0
        %388 = vmatpush.msra.mxu0 %v371
        %389 = vmatmul.f32.gmra.mxu0 %v368
        %v390 = vpop.f32.mrf.mxu0
        %v391 = vadd.f32 0.0, %v390
        %392 = vdwg.mxu0
        %v393 = vmul.f32 %v391, 0.001953125
        %vm394 = vcmask 15360
        %v396 = vsel %vm394, %v350, 0
        %vm398 = vcmask 1041408
        %v400 = vsel %vm398, %v393, 0
        %402 = vmatpush.msra.mxu0 0.0
        %403 = vmatpush.msra.mxu0 0.0
        %404 = vmatpush.msra.mxu0 0.0
        %405 = vmatpush.msra.mxu0 0.0
        %406 = vmatpush.msra.mxu0 0.0
        %407 = vmatpush.msra.mxu0 0.0
        %408 = vmatpush.msra.mxu0 0.0
        %409 = vmatpush.msra.mxu0 0.0
        %410 = vmatpush.msra.mxu0 0.0
        %411 = vmatpush.msra.mxu0 0.0
        %412 = vmatpush.msra.mxu0 0.0
        %413 = vmatpush.msra.mxu0 0.0
        %414 = vmatpush.msra.mxu0 0.0
        %415 = vmatpush.msra.mxu0 0.0
        %416 = vmatpush.msra.mxu0 0.0
        %417 = vmatpush.msra.mxu0 %v400
        %418 = vmatmul.f32.gmra.mxu0 %v396
        %v419 = vpop.f32.mrf.mxu0
        %v420 = vadd.f32 0.0, %v419
        %421 = vdwg.mxu0
        %v422 = vsub.f32 %v349, %v420
        %424 = vset.pattern.permute.xlu0 0
        %425 = vperm.xlu0 %424, %v422
        %v426 = vpop.permute.xlu0 %425
        %v428 = vunpack.c.l.s4 839922192
        %v429 = vunpack.c.0.s8 %v428
        %v430 = vperm.slane %v426, %v429
        %v432 = vadd.f32 %v348, %v430
        %v433 = vmul.f32 %v432, %v432
        %435 = vst [vmem:[#allocation1] ss:$2 sm:$0xff] %v433
        %v436 = vld.sshfl [vmem:[#allocation1] sm:$0xff pattern:$0x75316420]
        %v437 = vld.sshfl [vmem:[#allocation1 + $0x8] sm:$0xff pattern:$0x75316420]
        %v440 = vsel %vm358, %v436, 0.0
        %v441 = vsel %vm358, %v437, 0.0
        %v442 = vadd.f32 %v440, %v441
        %443 = vadd.xlane.f32.xlu0 %v442
        %v444 = vpop.xlane.xlu0 %443
        %v446 = vsel %vm358, %v444, 0
        %448 = vmatpush.msra.mxu0 0.0
        %449 = vmatpush.msra.mxu0 0.0
        %450 = vmatpush.msra.mxu0 0.0
        %451 = vmatpush.msra.mxu0 0.0
        %452 = vmatpush.msra.mxu0 0.0
        %453 = vmatpush.msra.mxu0 0.0
        %454 = vmatpush.msra.mxu0 0.0
        %455 = vmatpush.msra.mxu0 0.0
        %456 = vmatpush.msra.mxu0 0.0
        %457 = vmatpush.msra.mxu0 0.0
        %458 = vmatpush.msra.mxu0 0.0
        %459 = vmatpush.msra.mxu0 0.0
        %460 = vmatpush.msra.mxu0 0.0
        %461 = vmatpush.msra.mxu0 0.0
        %462 = vmatpush.msra.mxu0 0.0
        %463 = vmatpush.msra.mxu0 %v446
        %464 = vmatmul.f32.gmra.mxu0 %v368
        %v465 = vpop.f32.mrf.mxu0
        %v466 = vadd.f32 0.0, %v465
        %467 = vdwg.mxu0
        %v468 = vmul.f32 %v466, 0.001953125
        %v469 = vadd.f32 %v468, 1e-05
        %v470 = vrsqrt.pop %v469
        %v471 = vmul.f32 %v470, %v469
        %v472 = vmul.f32 %v471, %v470
        %v473 = vmul.f32 0.5, %v472
        %v474 = vsub.f32 1.5, %v473
        %v475 = vmul.f32 %v470, %v474
        %vm476 = vweird.f32 %v469
        %vm477 = vweird.f32 %v470
        %vm478 = vmor %vm476, %vm477
        %v479 = vsel %vm478, %v470, %v475
        %v481 = vsel %vm398, %v479, 0
        %483 = vmatpush.msra.mxu0 0.0
        %484 = vmatpush.msra.mxu0 0.0
        %485 = vmatpush.msra.mxu0 0.0
        %486 = vmatpush.msra.mxu0 0.0
        %487 = vmatpush.msra.mxu0 0.0
        %488 = vmatpush.msra.mxu0 0.0
        %489 = vmatpush.msra.mxu0 0.0
        %490 = vmatpush.msra.mxu0 0.0
        %491 = vmatpush.msra.mxu0 0.0
        %492 = vmatpush.msra.mxu0 0.0
        %493 = vmatpush.msra.mxu0 0.0
        %494 = vmatpush.msra.mxu0 0.0
        %495 = vmatpush.msra.mxu0 0.0
        %496 = vmatpush.msra.mxu0 0.0
        %497 = vmatpush.msra.mxu0 0.0
        %498 = vmatpush.msra.mxu0 %v481
        %499 = vmatmul.f32.gmra.mxu0 %v396
        %v500 = vpop.f32.mrf.mxu0
        %v501 = vadd.f32 0.0, %v500
        %502 = vdwg.mxu0
        %v503 = vld [vmem:[%s2] sm:$0xf]
        %v504 = vmul.f32 %v503, %v501
        %506 = vset.pattern.permute.xlu0 0
        %507 = vperm.xlu0 %506, %v504
        %v508 = vpop.permute.xlu0 %507
        %v510 = vunpack.c.l.s4 839922192
        %v511 = vunpack.c.0.s8 %v510
        %v512 = vperm.slane %v508, %v511
        %v514 = vmul.f32 %v432, %v512
        %v515 = vld [vmem:[%s3] sm:$0xf]
        %517 = vset.pattern.permute.xlu0 0
        %518 = vperm.xlu0 %517, %v515
        %v519 = vpop.permute.xlu0 %518
        %v521 = vunpack.c.l.s4 839922192
        %v522 = vunpack.c.0.s8 %v521
        %v523 = vperm.slane %v519, %v522
        %v525 = vadd.f32 %v514, %v523
        %v526 = vxor.u32 %v525, 2147483648
        %v527 = vmul.f32 %v526, 1.442695
        %v528 = vpow.pop %v527
        %v529 = vadd.f32 %v528, 1.0
        %v530 = vrcp.pop %v529
        %v531 = vmul.f32 %v529, %v530
        %v532 = vsub.f32 1.0, %v531
        %v533 = vmul.f32 %v530, %v532
        %v534 = vadd.f32 %v530, %v533
        %vm535 = vweird.f32 %v529
        %vm536 = vweird.f32 %v530
        %vm537 = vmor %vm535, %vm536
        %v538 = vsel %vm537, %v530, %v534
        %v539 = vand.u32 2147483647, %v529
        %vm540 = vcmp.eq.f32.partialorder %v539, 8.507059e+37
        %v541 = vand.u32 %v529, 2147483648
        %v542 = vor.u32 1.1754944e-38, %v541
        %v543 = vsel %vm540, %v542, %v538
        %v544 = vmul.f32 1.0, %v543
        %v545 = vmul.f32 %v525, %v544
        %v546 = vld [vmem:[%s6] sm:$0x77]
        %548 = vst [vmem:[#allocation1] ss:$2 sm:$0xff] %v545
        %v549 = vld.sshfl [vmem:[#allocation1] sm:$0xff pattern:$0x75316420]
        %v550 = vld.sshfl [vmem:[#allocation1 + $0x8] sm:$0xff pattern:$0x75316420]
        %553 = vrot.lane.b32.xlu0 %v549, 127
        %v554 = vpop.permute.xlu0 %553
        %555 = vrot.lane.b32.xlu0 %v550, 127
        %v556 = vpop.permute.xlu0 %555
        %v557 = vlaneseq
        %v558 = vand.u32 %v557, 127
        %vm559 = vcmp.lt.s32.totalorder %v558, 127
        %v560 = vsel %vm559, %v554, %v556
        %v561 = vsel %vm559, %v556, %v554
        %v563 = vperm.slane %v546, 0
        %v564 = vperm.slane %v546, 4
        %v567 = vperm.slane %v563, 0
        %v568 = vperm.slane %v564, 0
        %v569 = vmul.f32 %v560, %v567
        %v570 = vmul.f32 %v561, %v568
        %571 = vst [vmem:[#allocation1] ss:$2 sm:$0xff] %v545
        %v572 = vld.sshfl [vmem:[#allocation1] sm:$0xff pattern:$0x75316420]
        %v573 = vld.sshfl [vmem:[#allocation1 + $0x8] sm:$0xff pattern:$0x75316420]
        %576 = vrot.lane.b32.xlu0 %v572, 112
        %v577 = vpop.permute.xlu0 %576
        %578 = vrot.lane.b32.xlu0 %v573, 112
        %v579 = vpop.permute.xlu0 %578
        %vm580 = vcmp.lt.s32.totalorder %v558, 112
        %v581 = vsel %vm580, %v577, %v579
        %v582 = vsel %vm580, %v579, %v577
        %v583 = vperm.slane %v546, 1
        %v584 = vperm.slane %v546, 5
        %v587 = vperm.slane %v583, 1
        %v588 = vperm.slane %v584, 1
        %v589 = vmul.f32 %v581, %v587
        %v590 = vmul.f32 %v582, %v588
        %591 = vst [vmem:[#allocation1] ss:$2 sm:$0xff] %v545
        %v592 = vld.sshfl [vmem:[#allocation1] sm:$0xff pattern:$0x75316420]
        %v593 = vld.sshfl [vmem:[#allocation1 + $0x8] sm:$0xff pattern:$0x75316420]
        %596 = vrot.lane.b32.xlu0 %v592, 111
        %v597 = vpop.permute.xlu0 %596
        %598 = vrot.lane.b32.xlu0 %v593, 111
        %v599 = vpop.permute.xlu0 %598
        %vm600 = vcmp.lt.s32.totalorder %v558, 111
        %v601 = vsel %vm600, %v597, %v599
        %v602 = vsel %vm600, %v599, %v597
        %v603 = vperm.slane %v546, 2
        %v604 = vperm.slane %v546, 6
        %v607 = vperm.slane %v603, 2
        %v608 = vperm.slane %v604, 2
        %v609 = vmul.f32 %v601, %v607
        %v610 = vmul.f32 %v602, %v608
        %611 = vst [vmem:[#allocation1] ss:$2 sm:$0xff] %v545
        %v612 = vld.sshfl [vmem:[#allocation1] sm:$0xff pattern:$0x75316420]
        %v613 = vld.sshfl [vmem:[#allocation1 + $0x8] sm:$0xff pattern:$0x75316420]
        %v618 = vrot.slane %v569, 4
        %v619 = vrot.slane %v570, 4
        %v624 = vrot.slane %v609, 4
        %v625 = vrot.slane %v610, 4
        %v628 = vsel %vm358, %v612, %v618
        %v629 = vsel %vm358, %v613, %v619
        %v630 = vsel %vm358, %v589, %v624
        %v631 = vsel %vm358, %v590, %v625
        %v632 = vld [vmem:[%s7] sm:$0xff]
        %v633 = vld [vmem:[%s7 + $0x8] sm:$0xff]
        %v634 = vld [vmem:[%s7 + $0x10] sm:$0xff]
        %v635 = vld [vmem:[%s7 + $0x18] sm:$0xff]
        %v636 = vld [vmem:[%s8] sm:$0xff]
        %v637 = vld [vmem:[%s8 + $0x8] sm:$0xff]
        %v638 = vld [vmem:[%s8 + $0x10] sm:$0xff]
        %v639 = vld [vmem:[%s8 + $0x18] sm:$0xff]
        %641 = vset.pattern.permute.xlu0 0
        %642 = vperm.xlu0 %641, %v636
        %v643 = vpop.permute.xlu0 %642
        %646 = vset.pattern.permute.xlu0 0
        %647 = vperm.xlu0 %646, %v637
        %v648 = vpop.permute.xlu0 %647
        %651 = vset.pattern.permute.xlu0 0
        %652 = vperm.xlu0 %651, %v638
        %v653 = vpop.permute.xlu0 %652
        %656 = vset.pattern.permute.xlu0 0
        %657 = vperm.xlu0 %656, %v639
        %v658 = vpop.permute.xlu0 %657
        %vm660 = vcmask 130048
        %v662 = vsel %vm660, %v632, 0
        %v665 = vsel %vm660, %v633, 0
        %v668 = vsel %vm660, %v634, 0
        %v671 = vsel %vm660, %v635, 0
        %673 = vmatpush.msra.mxu0 0.0
        %674 = vmatpush.msra.mxu0 0.0
        %675 = vmatpush.msra.mxu0 0.0
        %676 = vmatpush.msra.mxu0 0.0
        %677 = vmatpush.msra.mxu0 0.0
        %678 = vmatpush.msra.mxu0 0.0
        %679 = vmatpush.msra.mxu0 0.0
        %680 = vmatpush.msra.mxu0 0.0
        %681 = vmatpush.msra.mxu0 0.0
        %682 = vmatpush.msra.mxu0 0.0
        %683 = vmatpush.msra.mxu0 0.0
        %684 = vmatpush.msra.mxu0 0.0
        %685 = vmatpush.msra.mxu0 0.0
        %686 = vmatpush.msra.mxu0 0.0
        %687 = vmatpush.msra.mxu0 %v630
        %688 = vmatpush.msra.mxu0 %v628
        %689 = vmatmul.f32.gmra.mxu0 %v662
        %v690 = vpop.f32.mrf.mxu0
        %v691 = vadd.f32 %v643, %v690
        %692 = vmatmul.f32.gmra.mxu0 %v665
        %v693 = vpop.f32.mrf.mxu0
        %v694 = vadd.f32 %v648, %v693
        %695 = vmatmul.f32.gmra.mxu0 %v668
        %v696 = vpop.f32.mrf.mxu0
        %v697 = vadd.f32 %v653, %v696
        %698 = vmatmul.f32.gmra.mxu0 %v671
        %v699 = vpop.f32.mrf.mxu0
        %v700 = vadd.f32 %v658, %v699
        %701 = vdwg.mxu0
        %702 = vmatpush.msra.mxu0 0.0
        %703 = vmatpush.msra.mxu0 0.0
        %704 = vmatpush.msra.mxu0 0.0
        %705 = vmatpush.msra.mxu0 0.0
        %706 = vmatpush.msra.mxu0 0.0
        %707 = vmatpush.msra.mxu0 0.0
        %708 = vmatpush.msra.mxu0 0.0
        %709 = vmatpush.msra.mxu0 0.0
        %710 = vmatpush.msra.mxu0 0.0
        %711 = vmatpush.msra.mxu0 0.0
        %712 = vmatpush.msra.mxu0 0.0
        %713 = vmatpush.msra.mxu0 0.0
        %714 = vmatpush.msra.mxu0 0.0
        %715 = vmatpush.msra.mxu0 0.0
        %716 = vmatpush.msra.mxu0 %v631
        %717 = vmatpush.msra.mxu0 %v629
        %718 = vmatmul.f32.gmra.mxu0 %v662
        %v719 = vpop.f32.mrf.mxu0
        %v720 = vadd.f32 %v643, %v719
        %721 = vmatmul.f32.gmra.mxu0 %v665
        %v722 = vpop.f32.mrf.mxu0
        %v723 = vadd.f32 %v648, %v722
        %724 = vmatmul.f32.gmra.mxu0 %v668
        %v725 = vpop.f32.mrf.mxu0
        %v726 = vadd.f32 %v653, %v725
        %727 = vmatmul.f32.gmra.mxu0 %v671
        %v728 = vpop.f32.mrf.mxu0
        %v729 = vadd.f32 %v658, %v728
        %730 = vdwg.mxu0
        %731 = vst [vmem:[%s338] sm:$0xff] %v691
        %732 = vst [vmem:[%s338 + $0x8] sm:$0xff] %v720
        %733 = vst [vmem:[%s338 + $0x10] sm:$0xff] %v694
        %734 = vst [vmem:[%s338 + $0x18] sm:$0xff] %v723
        %735 = vst [vmem:[%s338 + $0x20] sm:$0xff] %v697
        %736 = vst [vmem:[%s338 + $0x28] sm:$0xff] %v726
        %737 = vst [vmem:[%s338 + $0x30] sm:$0xff] %v700
        %738 = vst [vmem:[%s338 + $0x38] sm:$0xff] %v729
        %s739 = sand.u32 %s230, 1
        %s740 = scalar_lea.sflag [#allocation3], %s739
        %s741 = sand.u32 %s230, 1
        %s742 = smul.addr %s741, 64
        %s743 = scalar_lea.vmem [#allocation2], %s742
        // Predicated region
        $region57: #{tpu_custom_call.1} parent=55 // pred_check
          %p744 = pneg %p240
        $region58: #{tpu_custom_call.1} parent=55 // pred_check_branch
          %746 = sbr.rel (%p744) target = $region60
        $region59: #{tpu_custom_call.1} parent=55 // pred_region
          %748 = vsyncadd %s740, 0
          %s749 = smul.addr %s23, 8
          %s750 = smul.addr %s749, 8
          %s751 = scalar_lea.hbm %s9, %s750
          %s752 = sshll.u32 %s743, 4
          %s753 = int_to_ptr.vmem [resolvable:$true] %s752
          %s754 = sshll.u32 %s751, 4
          %s755 = int_to_ptr.hbm [resolvable:$true] %s754
          %760 = dma.vmem_to_hbm [thread:$0]  %s753, 1024, %s755, %s740, 256, 256, 16
        $region60: #{tpu_custom_call.1} parent=55 // pred_fallthru
          _
      $region56: #{tpu_custom_call.1} parent=5 // pred_fallthru
        _
      %p761 = scmp.le.s32.totalorder 2, %s18
      // Predicated region
      $region61: #{tpu_custom_call.1} parent=5 // pred_check
        %p762 = pneg %p761
      $region62: #{tpu_custom_call.1} parent=5 // pred_check_branch
        %764 = sbr.rel (%p762) target = $region64
      $region63: #{tpu_custom_call.1} parent=5 // pred_region
        %s765 = ssub.s32 %s18, 2
        // Predicated region
        $region65: #{tpu_custom_call.1} parent=63 // pred_check
          %p766 = pneg %p246
        $region66: #{tpu_custom_call.1} parent=63 // pred_check_branch
          %768 = sbr.rel (%p766) target = $region68
        $region67: #{tpu_custom_call.1} parent=63 // pred_region
          %s769 = sand.u32 %s231, 1
          %s770 = scalar_lea.sflag [#allocation3], %s769
          %s771 = sand.u32 %s231, 1
          %s772 = smul.addr %s771, 64
          %s773 = scalar_lea.vmem [#allocation2], %s772
          %775 = dma.done %s770, 1024
        $region68: #{tpu_custom_call.1} parent=63 // pred_fallthru
          _
      $region64: #{tpu_custom_call.1} parent=5 // pred_fallthru
        _
    $region6: #{tpu_custom_call.1} parent=1 // loop_footer
      %s22 = sadd.s32 1, %s18
    $region7: #{tpu_custom_call.1} parent=1 // loop_footer_branch
      %17 = sbr.rel target = $region3
    $region8: #{tpu_custom_call.1} parent=1 // loop_exit
      _
    %776 = vsyncpa [#allocation3], 1
    %s777 = scalar_lea.sflag [#allocation3], 1
    %778 = vsyncpa %s777, 1

</llo_original>
